<compile_context>
chip_gen: v6e
topology: v6e:2x2x1
jax: 0.10.0
libtpu: 0.0.40
codegen_flags: <defaults>
</compile_context>

<pallas_src>
import functools

import jax
import jax.numpy as jnp
from jax.experimental import pallas as pl
from jax.experimental.pallas import tpu as pltpu


def _kldiv_kernel(e1_ref, e2_ref, out_ref, *, inv_t, row_tile, n_valid, needs_mask):
    x1 = e1_ref[...].astype(jnp.float32) * inv_t      # (row_tile, C)
    x2 = e2_ref[...].astype(jnp.float32) * inv_t      # (row_tile, C)

    # Un-normalized target softmax: p = ex1 / z1.
    m1 = jnp.max(x1, axis=-1, keepdims=True)
    s1 = x1 - m1
    ex1 = jnp.exp(s1)
    z1 = jnp.sum(ex1, axis=-1, keepdims=True)

    # Only the shifted logits and partition function of the input are needed.
    m2 = jnp.max(x2, axis=-1, keepdims=True)
    s2 = x2 - m2
    z2 = jnp.sum(jnp.exp(s2), axis=-1, keepdims=True)

    # Fused KL row sum (identical math, no full-tile logp/logq intermediates):
    #   sum_c p*(logp - logq) = (1/z1) * sum_c ex1*(s1 - s2) + (log z2 - log z1)
    # When p underflows (ex1 == 0) the contribution is exactly 0, matching
    # F.kl_div's xlogy convention.
    num = jnp.sum(ex1 * (s1 - s2), axis=-1, keepdims=True)   # (row_tile, 1)
    row_kl = num / z1 + (jnp.log(z2) - jnp.log(z1))          # per-row exact divide

    if needs_mask:  # ragged last block: OOB rows hold garbage -> zero them
        base = pl.program_id(0) * row_tile
        rid = jax.lax.broadcasted_iota(jnp.int32, row_kl.shape, 0) + base
        row_kl = jnp.where(rid < n_valid, row_kl, 0.0)

    # Per-row partials; grid axis is "parallel" (no serialized accumulator).
    # TODO(synk): pack partials into a lane-dense (1, row_tile) slab if profiles
    # show vst.msk / writeback-DMA pressure from the (row_tile, 1) output.
    out_ref[...] = row_kl


def kldiv_loss(emb1, emb2, temperature, *, row_tile=None):
    """Pallas implementation of KLDivLoss(temperature).forward(emb1, emb2).

    Inputs may be f32 or bf16 (bf16 is streamed as-is and upcast in-kernel).
    """
    assert emb1.shape == emb2.shape and emb1.ndim == 2
    n, c = emb1.shape
    itemsize = jnp.dtype(emb1.dtype).itemsize

    # Sublane packing: f32 -> 8 rows/vreg, bf16 -> 16, int8/fp8 -> 32.
    align = {4: 8, 2: 16, 1: 32}.get(itemsize, 8)

    if row_tile is None:
        # ~2 MiB of streamed input per block.  With 2 inputs x 2 pipeline
        # buffers plus ~3 tile-sized f32 temporaries this stays well inside the
        # 32 MiB scoped VMEM limit (v7x-safe) while already sitting on the HBM
        # roofline per measured tiling data.
        target_block_bytes = 2 << 20
        t = max(target_block_bytes // max(c * itemsize, 1), align)
        row_tile = int(min(t, 4096))
    row_tile = max(int(row_tile), 1)

    if row_tile >= n:
        row_tile = n                                   # single block == full batch
    else:
        row_tile = max((row_tile // align) * align, align)   # sublane aligned
        if row_tile >= n:
            row_tile = n

    num_blocks = pl.cdiv(n, row_tile)
    needs_mask = (num_blocks * row_tile) != n          # ragged last block only

    kernel = functools.partial(
        _kldiv_kernel,
        inv_t=1.0 / float(temperature),
        row_tile=row_tile,
        n_valid=n,
        needs_mask=bool(needs_mask),
    )

    cost = pl.CostEstimate(
        flops=11 * n * c,
        transcendentals=2 * n * c + 2 * n,
        bytes_accessed=2 * n * c * itemsize + n * 4,
    )

    # TODO(synk): on v5e/v6e (128 MiB VMEM) optionally set
    # pipeline_mode=pl.Buffered(3) on the two input BlockSpecs if profiles show
    # exposed DMA at block boundaries; keep the default depth-2 on v7x.
    # TODO(synk): for small C (< 128) a lane-padded layout was suggested, but it
    # increases streamed HBM bytes for this bandwidth-bound kernel; left as-is.
    partial = pl.pallas_call(
        kernel,
        out_shape=jax.ShapeDtypeStruct((n, 1), jnp.float32),
        grid_spec=pltpu.PrefetchScalarGridSpec(
            num_scalar_prefetch=0,
            grid=(num_blocks,),
            in_specs=[
                pl.BlockSpec((row_tile, c), lambda i: (i, 0)),
                pl.BlockSpec((row_tile, c), lambda i: (i, 0)),
            ],
            out_specs=pl.BlockSpec((row_tile, 1), lambda i: (i, 0)),
        ),
        compiler_params=pltpu.CompilerParams(
            # Independent per-block partials -> both TensorCores participate.
            dimension_semantics=("parallel",),
            vmem_limit_bytes=32 << 20,
        ),
        cost_estimate=cost,
    )(emb1, emb2)

    # Tiny final reduction (n floats) + mean, in plain JAX outside the kernel.
    return jnp.sum(partial) / jnp.float32(n)


def _reference(emb1, emb2, temperature):
    p = jax.nn.softmax(emb1 / temperature, axis=1)
    logp = jax.nn.log_softmax(emb1 / temperature, axis=1)
    logq = jax.nn.log_softmax(emb2 / temperature, axis=1)
    kl = p * (logp - logq)
    return jnp.mean(jnp.sum(kl, axis=1))


if __name__ == "__main__":
    key = jax.random.PRNGKey(0)
    k1, k2 = jax.random.split(key)
    N, C = 20, 48                  # small, deliberately not multiples of 8/128
    temperature = 4.0

    emb1 = jax.random.normal(k1, (N, C), dtype=jnp.float32)
    emb2 = jax.random.normal(k2, (N, C), dtype=jnp.float32)

    ref = _reference(emb1, emb2, temperature)

    # Forced small tile -> multi-block grid + ragged-last-block mask exercised.
    loss_tiled = jax.block_until_ready(kldiv_loss(emb1, emb2, temperature, row_tile=8))
    # Auto-sized tile (the production path).
    loss_auto = jax.block_until_ready(kldiv_loss(emb1, emb2, temperature))

    assert jnp.allclose(loss_tiled, ref, rtol=1e-4, atol=1e-6), (loss_tiled, ref)
    assert jnp.allclose(loss_auto, ref, rtol=1e-4, atol=1e-6), (loss_auto, ref)

    print("KERNEL_OK")
</pallas_src>

<mosaic_0001>
module attributes {stable_mosaic.version = 11 : i64} {
  func.func @_kldiv_kernel(%arg0: i32, %arg1: memref<8x48xf32, #tpu.memory_space<vmem>>, %arg2: memref<8x48xf32, #tpu.memory_space<vmem>>, %arg3: memref<8x1xf32, #tpu.memory_space<vmem>>) attributes {dimension_semantics = [#tpu.dimension_semantics<parallel>], iteration_bounds = array<i64: 3>, scalar_prefetch = 0 : i64, scratch_operands = 0 : i64, tpu.core_type = #tpu.core_type<tc>, window_params = [{transform_indices = @transform_0, window_bounds = array<i64: 8, 48>}, {transform_indices = @transform_1, window_bounds = array<i64: 8, 48>}, {transform_indices = @transform_2, window_bounds = array<i64: 8, 1>}]} {
    %c0 = arith.constant 0 : index
    %c0_0 = arith.constant 0 : index
    %0 = vector.load %arg1[%c0, %c0_0] : memref<8x48xf32, #tpu.memory_space<vmem>>, vector<8x48xf32>
    %cst = arith.constant 2.500000e-01 : f32
    %1 = vector.broadcast %cst : f32 to vector<8x48xf32>
    %2 = arith.mulf %0, %1 : vector<8x48xf32>
    %c0_1 = arith.constant 0 : index
    %c0_2 = arith.constant 0 : index
    %3 = vector.load %arg2[%c0_1, %c0_2] : memref<8x48xf32, #tpu.memory_space<vmem>>, vector<8x48xf32>
    %cst_3 = arith.constant 2.500000e-01 : f32
    %4 = vector.broadcast %cst_3 : f32 to vector<8x48xf32>
    %5 = arith.mulf %3, %4 : vector<8x48xf32>
    %cst_4 = arith.constant dense<0xFF800000> : vector<8xf32>
    %6 = vector.multi_reduction <maximumf>, %2, %cst_4 [1] : vector<8x48xf32> to vector<8xf32>
    %7 = vector.shape_cast %6 : vector<8xf32> to vector<8x1xf32>
    %8 = vector.broadcast %7 : vector<8x1xf32> to vector<8x48xf32>
    %9 = arith.subf %2, %8 : vector<8x48xf32>
    %10 = math.exp %9 : vector<8x48xf32>
    %cst_5 = arith.constant dense<0.000000e+00> : vector<8xf32>
    %11 = vector.multi_reduction <add>, %10, %cst_5 [1] : vector<8x48xf32> to vector<8xf32>
    %12 = vector.shape_cast %11 : vector<8xf32> to vector<8x1xf32>
    %cst_6 = arith.constant dense<0xFF800000> : vector<8xf32>
    %13 = vector.multi_reduction <maximumf>, %5, %cst_6 [1] : vector<8x48xf32> to vector<8xf32>
    %14 = vector.shape_cast %13 : vector<8xf32> to vector<8x1xf32>
    %15 = vector.broadcast %14 : vector<8x1xf32> to vector<8x48xf32>
    %16 = arith.subf %5, %15 : vector<8x48xf32>
    %17 = math.exp %16 : vector<8x48xf32>
    %cst_7 = arith.constant dense<0.000000e+00> : vector<8xf32>
    %18 = vector.multi_reduction <add>, %17, %cst_7 [1] : vector<8x48xf32> to vector<8xf32>
    %19 = vector.shape_cast %18 : vector<8xf32> to vector<8x1xf32>
    %20 = arith.subf %9, %16 : vector<8x48xf32>
    %21 = arith.mulf %10, %20 : vector<8x48xf32>
    %cst_8 = arith.constant dense<0.000000e+00> : vector<8xf32>
    %22 = vector.multi_reduction <add>, %21, %cst_8 [1] : vector<8x48xf32> to vector<8xf32>
    %23 = vector.shape_cast %22 : vector<8xf32> to vector<8x1xf32>
    %24 = arith.divf %23, %12 : vector<8x1xf32>
    %25 = math.log %19 : vector<8x1xf32>
    %26 = math.log %12 : vector<8x1xf32>
    %27 = arith.subf %25, %26 : vector<8x1xf32>
    %28 = arith.addf %24, %27 : vector<8x1xf32>
    %c8_i32 = arith.constant 8 : i32
    %29 = arith.muli %arg0, %c8_i32 : i32
    %30 = tpu.iota {dimensions = array<i32: 0>} : vector<8x1xi32>
    %31 = vector.broadcast %29 : i32 to vector<8x1xi32>
    %32 = arith.addi %30, %31 : vector<8x1xi32>
    %c20_i32 = arith.constant 20 : i32
    %33 = vector.broadcast %c20_i32 : i32 to vector<8x1xi32>
    %34 = arith.cmpi slt, %32, %33 : vector<8x1xi32>
    %cst_9 = arith.constant 0.000000e+00 : f32
    %35 = vector.broadcast %cst_9 : f32 to vector<8x1xf32>
    %36 = arith.select %34, %28, %35 : vector<8x1xi1>, vector<8x1xf32>
    %c0_10 = arith.constant 0 : index
    %c0_11 = arith.constant 0 : index
    %37 = vector.load %arg3[%c0_10, %c0_11] : memref<8x1xf32, #tpu.memory_space<vmem>>, vector<8x1xf32>
    tpu.vector_store %arg3[%c0_10, %c0_11], %36 {strides = array<i32>} : memref<8x1xf32, #tpu.memory_space<vmem>>, vector<8x1xf32>,
    return
  }
  func.func @transform_0(%arg0: i32) -> (i32, i32) {
    %c0_i32 = arith.constant 0 : i32
    %c0_i32_0 = arith.constant 0 : i32
    return %arg0, %c0_i32 : i32, i32
  }
  func.func @transform_1(%arg0: i32) -> (i32, i32) {
    %c0_i32 = arith.constant 0 : i32
    %c0_i32_0 = arith.constant 0 : i32
    return %arg0, %c0_i32 : i32, i32
  }
  func.func @transform_2(%arg0: i32) -> (i32, i32) {
    %c0_i32 = arith.constant 0 : i32
    %c0_i32_0 = arith.constant 0 : i32
    return %arg0, %c0_i32 : i32, i32
  }
}

</mosaic_0001>

<llo_original>
// kernel: tpu_custom_call.1
$region0: #{tpu_custom_call.1}
  #allocation0 [shape = 'u32[]', space=smem, size = 0x4, offset = 0x4, fixed_abs, tag = 'smem constant byte address 0x4 - core index']
  #allocation1 [shape = 'u32[144,128]{1,0:T(1,128)}', space=vmem, size = 0x12000, scoped, tag = 'internal scratch']
  %s0 = inlined_call_operand.hbm [shape: f32[20,48], index: 0, kind: input, shape index: {}]
  %s1 = inlined_call_operand.hbm [shape: f32[20,48], index: 1, kind: input, shape index: {}]
  %s2 = inlined_call_operand.vmem [shape: f32[20,1], index: 2, kind: output, shape index: {}]
  %s3 = sld [smem:[#allocation0]]
  $region49: #{tpu_custom_call.1} parent=0
    _
  %s5 = ssub.s32 1, %s3
  %s6 = scalar_select 0, %s5, %s3
  $region1: #{tpu_custom_call.1} parent=0
    #allocation2 [shape = 'u8[8192]{0}', space=vmem, size = 0x2000, scoped, tag = 'input window, operand 0']
    #allocation3 [shape = 's32[2]{0}', space=sflag, size = 0x8, scoped, tag = 'scoped memory for tpu_custom_call.1']
    #allocation4 [shape = 'u8[8192]{0}', space=vmem, size = 0x2000, scoped, tag = 'input window, operand 1']
    #allocation5 [shape = 's32[2]{0}', space=sflag, size = 0x8, scoped, tag = 'scoped memory for tpu_custom_call.1']
    %7 = vsyncpa [#allocation3], 0
    %s8 = scalar_lea.sflag [#allocation3], 1
    %9 = vsyncpa %s8, 0
    %10 = vsyncpa [#allocation5], 0
    %s11 = scalar_lea.sflag [#allocation5], 1
    %12 = vsyncpa %s11, 0
    loop: start=0, step=1, limit=5
    $region2: #{tpu_custom_call.1} parent=1 // loop_pre_header
      _
    $region3: #{tpu_custom_call.1} parent=1 // loop_header
      %s14 = sphi 0, %s18
      %p15 = scmp.ge.s32.totalorder %s14, 5
      %s24 = sphi 0, %s26
      %s27 = sphi 0, %s24
      %s28 = sphi 0, %s27
      %s44 = sphi 0, %s28
      %s50 = sphi 0, %s52
      %s53 = sphi 0, %s50
      %s54 = sphi 0, %s53
      %s70 = sphi 0, %s54
      %s76 = sphi 0, %s78
      %s79 = sphi 0, %s76
      %s80 = sphi 0, %s79
      %s96 = sphi 0, %s80
    $region4: #{tpu_custom_call.1} parent=1 // loop_header_branch
      %17 = sbr.rel (%p15) target = $region8
    $region5: #{tpu_custom_call.1} parent=1 // loop_body
      %s19 = ssub.s32 %s14, 1
      %s20 = ssub.s32 %s14, 2
      %s21 = sadd.s32 %s14, 1
      %s22 = ssub.s32 %s14, %s21
      %p23 = scmp.eq.s32.totalorder %s22, 0
      %s25 = sadd.s32 %s24, 1
      %s26 = scalar_select %p23, %s24, %s25
      %p29 = pneg %p23
      %p30 = scmp.eq.s32.totalorder %s14, 2
      %p31 = por %p29, %p30
      %p32 = scmp.ne.s32.totalorder %s24, %s27
      %p33 = scmp.eq.s32.totalorder %s14, 0
      %p34 = por %p32, %p33
      %p35 = scmp.ne.s32.totalorder %s24, %s27
      %p36 = scmp.eq.s32.totalorder %s19, 2
      %p37 = por %p35, %p36
      %p38 = scmp.ne.s32.totalorder %s27, %s28
      %p39 = scmp.eq.s32.totalorder %s19, 0
      %p40 = por %p38, %p39
      %p41 = scmp.ne.s32.totalorder %s27, %s28
      %p42 = scmp.eq.s32.totalorder %s20, 2
      %p43 = por %p41, %p42
      %p45 = scmp.ne.s32.totalorder %s28, %s44
      %p46 = scmp.eq.s32.totalorder %s20, 0
      %p47 = por %p45, %p46
      %s48 = ssub.s32 %s14, %s21
      %p49 = scmp.eq.s32.totalorder %s48, 0
      %s51 = sadd.s32 %s50, 1
      %s52 = scalar_select %p49, %s50, %s51
      %p55 = pneg %p49
      %p56 = scmp.eq.s32.totalorder %s14, 2
      %p57 = por %p55, %p56
      %p58 = scmp.ne.s32.totalorder %s50, %s53
      %p59 = scmp.eq.s32.totalorder %s14, 0
      %p60 = por %p58, %p59
      %p61 = scmp.ne.s32.totalorder %s50, %s53
      %p62 = scmp.eq.s32.totalorder %s19, 2
      %p63 = por %p61, %p62
      %p64 = scmp.ne.s32.totalorder %s53, %s54
      %p65 = scmp.eq.s32.totalorder %s19, 0
      %p66 = por %p64, %p65
      %p67 = scmp.ne.s32.totalorder %s53, %s54
      %p68 = scmp.eq.s32.totalorder %s20, 2
      %p69 = por %p67, %p68
      %p71 = scmp.ne.s32.totalorder %s54, %s70
      %p72 = scmp.eq.s32.totalorder %s20, 0
      %p73 = por %p71, %p72
      %s74 = ssub.s32 %s14, %s21
      %p75 = scmp.eq.s32.totalorder %s74, 0
      %s77 = sadd.s32 %s76, 1
      %s78 = scalar_select %p75, %s76, %s77
      %p81 = pneg %p75
      %p82 = scmp.eq.s32.totalorder %s14, 2
      %p83 = por %p81, %p82
      %p84 = scmp.ne.s32.totalorder %s76, %s79
      %p85 = scmp.eq.s32.totalorder %s14, 0
      %p86 = por %p84, %p85
      %p87 = scmp.ne.s32.totalorder %s76, %s79
      %p88 = scmp.eq.s32.totalorder %s19, 2
      %p89 = por %p87, %p88
      %p90 = scmp.ne.s32.totalorder %s79, %s80
      %p91 = scmp.eq.s32.totalorder %s19, 0
      %p92 = por %p90, %p91
      %p93 = scmp.ne.s32.totalorder %s79, %s80
      %p94 = scmp.eq.s32.totalorder %s20, 2
      %p95 = por %p93, %p94
      %p97 = scmp.ne.s32.totalorder %s80, %s96
      %p98 = scmp.eq.s32.totalorder %s20, 0
      %p99 = por %p97, %p98
      %p100 = scmp.le.s32.totalorder 1, %s14
      %p101 = scmp.lt.s32.totalorder %s14, 4
      %p102 = pnand %p100, %p101
      %p103 = pneg %p102
      // Predicated region
      $region9: #{tpu_custom_call.1} parent=5 // pred_check
        _
      $region10: #{tpu_custom_call.1} parent=5 // pred_check_branch
        %105 = sbr.rel (%p102) target = $region12
      $region11: #{tpu_custom_call.1} parent=5 // pred_region
        %s106 = ssub.s32 %s14, 1
      $region12: #{tpu_custom_call.1} parent=5 // pred_fallthru
        _
      %p107 = scmp.lt.s32.totalorder %s14, 3
      // Predicated region
      $region13: #{tpu_custom_call.1} parent=5 // pred_check
        %p108 = pneg %p107
      $region14: #{tpu_custom_call.1} parent=5 // pred_check_branch
        %110 = sbr.rel (%p108) target = $region16
      $region15: #{tpu_custom_call.1} parent=5 // pred_region
        // Predicated region
        $region17: #{tpu_custom_call.1} parent=15 // pred_check
          %p111 = pneg %p34
        $region18: #{tpu_custom_call.1} parent=15 // pred_check_branch
          %113 = sbr.rel (%p111) target = $region20
        $region19: #{tpu_custom_call.1} parent=15 // pred_region
          %s114 = sand.u32 %s24, 1
          %s115 = scalar_lea.sflag [#allocation3], %s114
          %s116 = sand.u32 %s24, 1
          %s117 = smul.addr %s116, 8
          %s118 = scalar_lea.vmem [#allocation2], %s117
          %s120 = ssub.s32 128, 128
          %121 = vsyncadd %s115, %s120
          %s122 = smul.addr %s14, 128
          %s123 = scalar_lea.hbm %s0, %s122
          %s125 = sshll.u32 %s118, 4
          %s126 = int_to_ptr.vmem [resolvable:$true] %s125
          %128 = dma.hbm_to_vmem [thread:$0]  %s123, 128, %s126, %s115
        $region20: #{tpu_custom_call.1} parent=15 // pred_fallthru
          _
        // Predicated region
        $region21: #{tpu_custom_call.1} parent=15 // pred_check
          %p129 = pneg %p60
        $region22: #{tpu_custom_call.1} parent=15 // pred_check_branch
          %131 = sbr.rel (%p129) target = $region24
        $region23: #{tpu_custom_call.1} parent=15 // pred_region
          %s132 = sand.u32 %s50, 1
          %s133 = scalar_lea.sflag [#allocation5], %s132
          %s134 = sand.u32 %s50, 1
          %s135 = smul.addr %s134, 8
          %s136 = scalar_lea.vmem [#allocation4], %s135
          %s138 = ssub.s32 128, 128
          %139 = vsyncadd %s133, %s138
          %s140 = smul.addr %s14, 128
          %s141 = scalar_lea.hbm %s1, %s140
          %s143 = sshll.u32 %s136, 4
          %s144 = int_to_ptr.vmem [resolvable:$true] %s143
          %146 = dma.hbm_to_vmem [thread:$0]  %s141, 128, %s144, %s133
        $region24: #{tpu_custom_call.1} parent=15 // pred_fallthru
          _
      $region16: #{tpu_custom_call.1} parent=5 // pred_fallthru
        _
      %p147 = scmp.le.s32.totalorder 1, %s14
      %p148 = scmp.lt.s32.totalorder %s14, 4
      %p149 = pnand %p147, %p148
      %p150 = pneg %p149
      // Predicated region
      $region25: #{tpu_custom_call.1} parent=5 // pred_check
        _
      $region26: #{tpu_custom_call.1} parent=5 // pred_check_branch
        %152 = sbr.rel (%p149) target = $region28
      $region27: #{tpu_custom_call.1} parent=5 // pred_region
        %s153 = ssub.s32 %s14, 1
        %s154 = sand.u32 %s27, 1
        %s155 = scalar_lea.sflag [#allocation3], %s154
        %s156 = sand.u32 %s27, 1
        %s157 = smul.addr %s156, 8
        %s158 = scalar_lea.vmem [#allocation2], %s157
        // Predicated region
        $region29: #{tpu_custom_call.1} parent=27 // pred_check
          %p159 = pneg %p40
        $region30: #{tpu_custom_call.1} parent=27 // pred_check_branch
          %161 = sbr.rel (%p159) target = $region32
        $region31: #{tpu_custom_call.1} parent=27 // pred_region
          %162 = dma.done %s155, 128
        $region32: #{tpu_custom_call.1} parent=27 // pred_fallthru
          _
        %s163 = sand.u32 %s53, 1
        %s164 = scalar_lea.sflag [#allocation5], %s163
        %s165 = sand.u32 %s53, 1
        %s166 = smul.addr %s165, 8
        %s167 = scalar_lea.vmem [#allocation4], %s166
        // Predicated region
        $region33: #{tpu_custom_call.1} parent=27 // pred_check
          %p168 = pneg %p66
        $region34: #{tpu_custom_call.1} parent=27 // pred_check_branch
          %170 = sbr.rel (%p168) target = $region36
        $region35: #{tpu_custom_call.1} parent=27 // pred_region
          %171 = dma.done %s164, 128
        $region36: #{tpu_custom_call.1} parent=27 // pred_fallthru
          _
        %s172 = sand.u32 %s27, 1
        %s173 = scalar_lea.sflag [#allocation3], %s172
        %s174 = sand.u32 %s27, 1
        %s175 = smul.addr %s174, 8
        %s176 = scalar_lea.vmem [#allocation2], %s175
        %p177 = pneg %p40
        %p178 = pneg %p37
        %s179 = sand.u32 %s53, 1
        %s180 = scalar_lea.sflag [#allocation5], %s179
        %s181 = sand.u32 %s53, 1
        %s182 = smul.addr %s181, 8
        %s183 = scalar_lea.vmem [#allocation4], %s182
        %p184 = pneg %p66
        %p185 = pneg %p63
        %p186 = pneg %p92
        %p187 = pneg %p89
        %p188 = scmp.lt.s32.totalorder %s19, 2
        %s189 = scalar_select %p188, %s19, 2
        %s190 = smul.addr %s189, 8
        %s191 = scalar_lea.vmem %s2, %s190
        %p192 = scmp.lt.s32.totalorder %s19, 2
        %s193 = scalar_select %p192, %s19, 2
        %s194 = smul.addr %s193, 8
        %s195 = scalar_lea.vmem %s2, %s194
        %v196 = vld [vmem:[%s158] sm:$0xff]
        %v197 = vmul.f32 %v196, 0.25
        %v198 = vld [vmem:[%s167] sm:$0xff]
        %v199 = vmul.f32 %v198, 0.25
        %vm200 = vcmask 392192
        %v201 = vsel %vm200, %v197, -inf
        %202 = vmax.xlane.f32.xlu0 %v201
        %v203 = vpop.xlane.xlu0 %202
        %v204 = vsub.f32 %v197, %v203
        %v205 = vmul.f32 %v204, 1.442695
        %v206 = vpow.pop %v205
        %v207 = vsel %vm200, %v206, 0.0
        %208 = vadd.xlane.f32.xlu0 %v207
        %v209 = vpop.xlane.xlu0 %208
        %v210 = vsel %vm200, %v199, -inf
        %211 = vmax.xlane.f32.xlu0 %v210
        %v212 = vpop.xlane.xlu0 %211
        %v213 = vsub.f32 %v199, %v212
        %v214 = vmul.f32 %v213, 1.442695
        %v215 = vpow.pop %v214
        %v216 = vsel %vm200, %v215, 0.0
        %217 = vadd.xlane.f32.xlu0 %v216
        %v218 = vpop.xlane.xlu0 %217
        %v219 = vsub.f32 %v204, %v213
        %v220 = vmul.f32 %v206, %v219
        %v221 = vsel %vm200, %v220, 0.0
        %222 = vadd.xlane.f32.xlu0 %v221
        %v223 = vpop.xlane.xlu0 %222
        %v224 = vrcp.pop %v209
        %v225 = vmul.f32 %v223, %v224
        %v226 = vlog2.pop %v218
        %v227 = vmul.f32 %v226, 0.6931472
        %v228 = vlog2.pop %v209
        %v229 = vmul.f32 %v228, 0.6931472
        %v230 = vsub.f32 %v227, %v229
        %v231 = vadd.f32 %v225, %v230
        %s232 = smul.u32 %s19, 8
        %v233 = vlaneseq
        %v234 = vshrl.u32 %v233, 7
        %v235 = vstv %s232
        %v236 = vadd.s32 %v234, %v235
        %vm237 = vcmp.lt.s32.totalorder %v236, 20
        %v238 = vsel %vm237, %v231, 0.0
        %vm239 = vcmask 7168
        %240 = vst.msk [vmem:[%s195] sm:$0xff] %vm239, %v238
        %p241 = scmp.lt.s32.totalorder %s19, 2
        %s242 = scalar_select %p241, %s19, 2
        %s243 = smul.addr %s242, 8
        %s244 = scalar_lea.vmem %s2, %s243
        // Predicated region
        $region37: #{tpu_custom_call.1} parent=27 // pred_check
          %p245 = pneg %p89
        $region38: #{tpu_custom_call.1} parent=27 // pred_check_branch
          %247 = sbr.rel (%p245) target = $region40
        $region39: #{tpu_custom_call.1} parent=27 // pred_region
          _
        $region40: #{tpu_custom_call.1} parent=27 // pred_fallthru
          _
      $region28: #{tpu_custom_call.1} parent=5 // pred_fallthru
        _
      %p248 = scmp.le.s32.totalorder 2, %s14
      // Predicated region
      $region41: #{tpu_custom_call.1} parent=5 // pred_check
        %p249 = pneg %p248
      $region42: #{tpu_custom_call.1} parent=5 // pred_check_branch
        %251 = sbr.rel (%p249) target = $region44
      $region43: #{tpu_custom_call.1} parent=5 // pred_region
        %s252 = ssub.s32 %s14, 2
        // Predicated region
        $region45: #{tpu_custom_call.1} parent=43 // pred_check
          %p253 = pneg %p95
        $region46: #{tpu_custom_call.1} parent=43 // pred_check_branch
          %255 = sbr.rel (%p253) target = $region48
        $region47: #{tpu_custom_call.1} parent=43 // pred_region
          %p256 = scmp.lt.s32.totalorder %s20, 2
          %s257 = scalar_select %p256, %s20, 2
          %s258 = smul.addr %s257, 8
          %s259 = scalar_lea.vmem %s2, %s258
        $region48: #{tpu_custom_call.1} parent=43 // pred_fallthru
          _
      $region44: #{tpu_custom_call.1} parent=5 // pred_fallthru
        _
    $region6: #{tpu_custom_call.1} parent=1 // loop_footer
      %s18 = sadd.s32 1, %s14
    $region7: #{tpu_custom_call.1} parent=1 // loop_footer_branch
      %13 = sbr.rel target = $region3
    $region8: #{tpu_custom_call.1} parent=1 // loop_exit
      _
    %260 = vsyncpa [#allocation3], 1
    %s261 = scalar_lea.sflag [#allocation3], 1
    %262 = vsyncpa %s261, 1
    %263 = vsyncpa [#allocation5], 1
    %s264 = scalar_lea.sflag [#allocation5], 1
    %265 = vsyncpa %s264, 1

</llo_original>
